<compile_context>
chip_gen: v7x
topology: tpu7x:2x2x1
jax: 0.10.0
libtpu: 0.0.40
codegen_flags: <defaults>
</compile_context>

<pallas_src>
import functools

import jax
import jax.numpy as jnp
from jax.experimental import pallas as pl
from jax.experimental.pallas import tpu as pltpu


def _round_up(n, m):
    return (n + m - 1) // m * m


def _maxout_kernel(x_ref, w_ref, b_ref, o_ref, *, size_units):
    """U matmuls folded with a running maximum, all lane-dense in VMEM.

    x_ref: [TB, D_in]            (compute dtype, e.g. bf16)
    w_ref: [U, D_in, G_pad]      (compute dtype; columns ordered (l, h), BN/bias folded)
    b_ref: [U, 1, G_pad]         (f32)
    o_ref: [TB, G_pad]           (G_pad = round_up(L*H, 128) -> full-vreg store)
    """
    x = x_ref[...]
    m = jnp.dot(x, w_ref[0], preferred_element_type=jnp.float32) + b_ref[0]
    for u in range(1, size_units):
        y = jnp.dot(x, w_ref[u], preferred_element_type=jnp.float32) + b_ref[u]
        m = jnp.maximum(m, y)
    o_ref[...] = m.astype(o_ref.dtype)


def maxout_forward(x, w, b, bn_gamma, bn_beta, bn_mean, bn_var, *,
                   hidden_size, size_units, eps=1e-5, batch_tile=512,
                   compute_dtype=jnp.bfloat16, out_dtype=None):
    """x: [B, D_in]; w: [L, D_in, H*U]; b/gamma/beta/mean/var: [L, H*U]."""
    num_layers, d_in, hu = w.shape
    L, H, U = num_layers, hidden_size, size_units
    assert hu == H * U
    B = x.shape[0]
    out_dtype = x.dtype if out_dtype is None else out_dtype

    # ---- host-side folding (exact algebra, done once by XLA, not per grid step) ----
    scale = bn_gamma * jax.lax.rsqrt(bn_var + eps)          # [L, H*U]
    shift = bn_beta - bn_mean * scale                       # [L, H*U]
    w_folded = w * scale[:, None, :]                        # [L, D_in, H*U]
    bias_folded = b * scale + shift                         # [L, H*U]

    # Column permutation (h, u) -> (u, l, h): the maxout becomes a running maximum over
    # U lane-aligned [B, L*H] slabs, already in concatenated output order.
    group = L * H
    g_pad = _round_up(group, 128)                           # lane-dense slabs & store
    w_all = (w_folded.reshape(L, d_in, H, U)
             .transpose(3, 1, 0, 2)                         # [U, D_in, L, H]
             .reshape(U, d_in, group))
    bias_all = (bias_folded.reshape(L, H, U)
                .transpose(2, 0, 1)                         # [U, L, H]
                .reshape(U, 1, group))
    if g_pad != group:                                      # zero-weight/zero-bias dummy cols
        w_all = jnp.pad(w_all, ((0, 0), (0, 0), (0, g_pad - group)))
        bias_all = jnp.pad(bias_all, ((0, 0), (0, 0), (0, g_pad - group)))

    # bf16 matmul operands (f32 MXU accumulation); bias stays f32 for the VPU add/max.
    x_c = x.astype(compute_dtype)
    w_all = w_all.astype(compute_dtype)
    bias_all = bias_all.astype(jnp.float32)

    # ---- batch tiling: biggest tile that still gives >=2 grid steps (v7x megacore) ----
    if B <= 8:
        tb = B
    else:
        tb = min(batch_tile, _round_up(pl.cdiv(B, 2), 8), _round_up(B, 8))
    grid = (pl.cdiv(B, tb),)

    cd_bytes = jnp.dtype(compute_dtype).itemsize
    out_bytes = jnp.dtype(out_dtype).itemsize
    weight_bytes = U * d_in * g_pad * cd_bytes + U * g_pad * 4
    cost = pl.CostEstimate(
        flops=2 * B * d_in * U * group,
        transcendentals=0,
        bytes_accessed=B * d_in * cd_bytes + weight_bytes + B * g_pad * out_bytes)
    # Footprint: double-buffered x + output tiles, resident weight/bias (single-buffered
    # when supported).  Cap well below v7x's 64 MiB physical VMEM.
    footprint = (2 * tb * d_in * cd_bytes + 2 * tb * g_pad * out_bytes
                 + 2 * weight_bytes)
    vmem_limit = min(48 * 1024 * 1024, max(16 * 1024 * 1024, 2 * footprint))

    def call(single_buffer_weights):
        resident = (dict(pipeline_mode=pl.Buffered(1))
                    if single_buffer_weights else {})
        return pl.pallas_call(
            functools.partial(_maxout_kernel, size_units=U),
            out_shape=jax.ShapeDtypeStruct((B, g_pad), out_dtype),
            grid=grid,
            in_specs=[
                pl.BlockSpec((tb, d_in), lambda i: (i, 0)),            # x: batch-tiled
                pl.BlockSpec((U, d_in, g_pad), lambda i: (0, 0, 0),    # W: VMEM resident
                             **resident),
                pl.BlockSpec((U, 1, g_pad), lambda i: (0, 0, 0),       # bias: resident
                             **resident),
            ],
            out_specs=pl.BlockSpec((tb, g_pad), lambda i: (i, 0)),
            compiler_params=pltpu.CompilerParams(
                dimension_semantics=("parallel",),
                vmem_limit_bytes=vmem_limit),
            cost_estimate=cost,
        )(x_c, w_all, bias_all)

    try:
        out_padded = call(True)
    except Exception:
        # Fallback for JAX versions without single-buffered pipeline_mode support:
        # default double-buffering of the (small, constant-index) weight/bias blocks.
        out_padded = call(False)

    return out_padded[:, :group]                            # strip lane-padding columns


def maxout_reference(x, w, b, bn_gamma, bn_beta, bn_mean, bn_var,
                     *, hidden_size, size_units, eps=1e-5):
    """Pure-JAX reference mirroring the PyTorch forward (eval mode)."""
    outs = []
    for l in range(w.shape[0]):
        y = x @ w[l] + b[l]
        y = (y - bn_mean[l]) / jnp.sqrt(bn_var[l] + eps) * bn_gamma[l] + bn_beta[l]
        y = y.reshape(x.shape[0], hidden_size, size_units)
        outs.append(jnp.max(y, axis=2))
    return jnp.concatenate(outs, axis=1)


if __name__ == "__main__":
    # Module hyper-params (small, consistent with Maxout(input_size, hidden_size)).
    batch = 8
    input_size = 16
    hidden_size = 32
    size_units = 2
    num_mo_layers = 3
    HU = hidden_size * size_units

    key = jax.random.PRNGKey(0)
    kx, kw, kb, kg, kbe, km, kv = jax.random.split(key, 7)

    x = jax.random.normal(kx, (batch, input_size), dtype=jnp.float32)
    # Linear params per layer (stacked over layer axis).
    w = jax.random.normal(kw, (num_mo_layers, input_size, HU), dtype=jnp.float32) * 0.1
    b = jax.random.normal(kb, (num_mo_layers, HU), dtype=jnp.float32) * 0.1
    # BatchNorm1d params / running stats per layer (deterministic, non-trivial).
    bn_gamma = 1.0 + 0.1 * jax.random.normal(kg, (num_mo_layers, HU), dtype=jnp.float32)
    bn_beta = 0.1 * jax.random.normal(kbe, (num_mo_layers, HU), dtype=jnp.float32)
    bn_mean = 0.1 * jax.random.normal(km, (num_mo_layers, HU), dtype=jnp.float32)
    bn_var = jnp.abs(1.0 + 0.1 * jax.random.normal(kv, (num_mo_layers, HU),
                                                   dtype=jnp.float32))

    ref = maxout_reference(x, w, b, bn_gamma, bn_beta, bn_mean, bn_var,
                           hidden_size=hidden_size, size_units=size_units)

    # Default fast path: bf16 matmul operands, f32 accumulation/epilogue.
    out = maxout_forward(x, w, b, bn_gamma, bn_beta, bn_mean, bn_var,
                         hidden_size=hidden_size, size_units=size_units)
    out = jax.block_until_ready(out)
    assert out.shape == (batch, num_mo_layers * hidden_size)
    assert jnp.allclose(out, ref, atol=2e-2, rtol=2e-2), "bf16 path mismatch vs reference"

    # Full-precision path: bit-for-bit close to the reference.
    out_f32 = maxout_forward(x, w, b, bn_gamma, bn_beta, bn_mean, bn_var,
                             hidden_size=hidden_size, size_units=size_units,
                             compute_dtype=jnp.float32)
    out_f32 = jax.block_until_ready(out_f32)
    assert jnp.allclose(out_f32, ref, atol=1e-5, rtol=1e-5), "f32 path mismatch vs reference"

    print("KERNEL_OK")
</pallas_src>

<mosaic_0001>
module attributes {stable_mosaic.version = 11 : i64} {
  func.func @_maxout_kernel(%arg0: i32, %arg1: memref<8x16xbf16, #tpu.memory_space<vmem>>, %arg2: memref<2x16x128xbf16, #tpu.memory_space<vmem>>, %arg3: memref<2x1x128xf32, #tpu.memory_space<vmem>>, %arg4: memref<8x128xf32, #tpu.memory_space<vmem>>) attributes {dimension_semantics = [#tpu.dimension_semantics<parallel>], iteration_bounds = array<i64: 1>, scalar_prefetch = 0 : i64, scratch_operands = 0 : i64, tpu.core_type = #tpu.core_type<tc>, window_params = [{transform_indices = @transform_0, window_bounds = array<i64: 8, 16>}, {pipeline_mode = #tpu.pipeline_mode<synchronous>, transform_indices = @transform_1, window_bounds = array<i64: 2, 16, 128>}, {pipeline_mode = #tpu.pipeline_mode<synchronous>, transform_indices = @transform_2, window_bounds = array<i64: 2, 1, 128>}, {transform_indices = @transform_3, window_bounds = array<i64: 8, 128>}]} {
    %c0 = arith.constant 0 : index
    %c0_0 = arith.constant 0 : index
    %0 = vector.load %arg1[%c0, %c0_0] : memref<8x16xbf16, #tpu.memory_space<vmem>>, vector<8x16xbf16>
    %c0_1 = arith.constant 0 : index
    %c0_2 = arith.constant 0 : index
    %c0_3 = arith.constant 0 : index
    %1 = vector.load %arg2[%c0_1, %c0_2, %c0_3] : memref<2x16x128xbf16, #tpu.memory_space<vmem>>, vector<1x16x128xbf16>
    %2 = vector.shape_cast %1 : vector<1x16x128xbf16> to vector<16x128xbf16>
    %cst = arith.constant dense<0.000000e+00> : vector<8x128xf32>
    %3 = tpu.matmul %0, %2, %cst {dimension_numbers = #tpu.dot_dimension_numbers<[1], [0], [0], [1], [0, 0, 1, 1], [], []>} : vector<8x16xbf16>, vector<16x128xbf16>, vector<8x128xf32> -> vector<8x128xf32>
    %c0_4 = arith.constant 0 : index
    %c0_5 = arith.constant 0 : index
    %c0_6 = arith.constant 0 : index
    %4 = vector.load %arg3[%c0_4, %c0_5, %c0_6] : memref<2x1x128xf32, #tpu.memory_space<vmem>>, vector<1x1x128xf32>
    %5 = vector.shape_cast %4 : vector<1x1x128xf32> to vector<1x128xf32>
    %6 = vector.broadcast %5 : vector<1x128xf32> to vector<8x128xf32>
    %7 = arith.addf %3, %6 : vector<8x128xf32>
    %c1 = arith.constant 1 : index
    %c0_7 = arith.constant 0 : index
    %c0_8 = arith.constant 0 : index
    %8 = vector.load %arg2[%c1, %c0_7, %c0_8] : memref<2x16x128xbf16, #tpu.memory_space<vmem>>, vector<1x16x128xbf16>
    %9 = vector.shape_cast %8 : vector<1x16x128xbf16> to vector<16x128xbf16>
    %cst_9 = arith.constant dense<0.000000e+00> : vector<8x128xf32>
    %10 = tpu.matmul %0, %9, %cst_9 {dimension_numbers = #tpu.dot_dimension_numbers<[1], [0], [0], [1], [0, 0, 1, 1], [], []>} : vector<8x16xbf16>, vector<16x128xbf16>, vector<8x128xf32> -> vector<8x128xf32>
    %c1_10 = arith.constant 1 : index
    %c0_11 = arith.constant 0 : index
    %c0_12 = arith.constant 0 : index
    %11 = vector.load %arg3[%c1_10, %c0_11, %c0_12] : memref<2x1x128xf32, #tpu.memory_space<vmem>>, vector<1x1x128xf32>
    %12 = vector.shape_cast %11 : vector<1x1x128xf32> to vector<1x128xf32>
    %13 = vector.broadcast %12 : vector<1x128xf32> to vector<8x128xf32>
    %14 = arith.addf %10, %13 : vector<8x128xf32>
    %15 = arith.maximumf %7, %14 : vector<8x128xf32>
    %c0_13 = arith.constant 0 : index
    %c0_14 = arith.constant 0 : index
    %16 = vector.load %arg4[%c0_13, %c0_14] : memref<8x128xf32, #tpu.memory_space<vmem>>, vector<8x128xf32>
    tpu.vector_store %arg4[%c0_13, %c0_14], %15 {strides = array<i32>} : memref<8x128xf32, #tpu.memory_space<vmem>>, vector<8x128xf32>,
    return
  }
  func.func @transform_0(%arg0: i32) -> (i32, i32) {
    %c0_i32 = arith.constant 0 : i32
    %c0_i32_0 = arith.constant 0 : i32
    return %arg0, %c0_i32 : i32, i32
  }
  func.func @transform_1(%arg0: i32) -> (i32, i32, i32) {
    %c0_i32 = arith.constant 0 : i32
    %c0_i32_0 = arith.constant 0 : i32
    %c0_i32_1 = arith.constant 0 : i32
    %c0_i32_2 = arith.constant 0 : i32
    return %c0_i32, %c0_i32_0, %c0_i32_1 : i32, i32, i32
  }
  func.func @transform_2(%arg0: i32) -> (i32, i32, i32) {
    %c0_i32 = arith.constant 0 : i32
    %c0_i32_0 = arith.constant 0 : i32
    %c0_i32_1 = arith.constant 0 : i32
    %c0_i32_2 = arith.constant 0 : i32
    return %c0_i32, %c0_i32_0, %c0_i32_1 : i32, i32, i32
  }
  func.func @transform_3(%arg0: i32) -> (i32, i32) {
    %c0_i32 = arith.constant 0 : i32
    %c0_i32_0 = arith.constant 0 : i32
    return %arg0, %c0_i32 : i32, i32
  }
}

module attributes {stable_mosaic.version = 11 : i64} {
  func.func @_maxout_kernel(%arg0: i32, %arg1: memref<8x16xbf16, #tpu.memory_space<vmem>>, %arg2: memref<2x16x128xbf16, #tpu.memory_space<vmem>>, %arg3: memref<2x1x128xf32, #tpu.memory_space<vmem>>, %arg4: memref<8x128xf32, #tpu.memory_space<vmem>>) attributes {dimension_semantics = [#tpu.dimension_semantics<parallel>], iteration_bounds = array<i64: 1>, scalar_prefetch = 0 : i64, scratch_operands = 0 : i64, tpu.core_type = #tpu.core_type<tc>, window_params = [{transform_indices = @transform_0, window_bounds = array<i64: 8, 16>}, {pipeline_mode = #tpu.pipeline_mode<synchronous>, transform_indices = @transform_1, window_bounds = array<i64: 2, 16, 128>}, {pipeline_mode = #tpu.pipeline_mode<synchronous>, transform_indices = @transform_2, window_bounds = array<i64: 2, 1, 128>}, {transform_indices = @transform_3, window_bounds = array<i64: 8, 128>}]} {
    %c0 = arith.constant 0 : index
    %c0_0 = arith.constant 0 : index
    %0 = vector.load %arg1[%c0, %c0_0] : memref<8x16xbf16, #tpu.memory_space<vmem>>, vector<8x16xbf16>
    %c0_1 = arith.constant 0 : index
    %c0_2 = arith.constant 0 : index
    %c0_3 = arith.constant 0 : index
    %1 = vector.load %arg2[%c0_1, %c0_2, %c0_3] : memref<2x16x128xbf16, #tpu.memory_space<vmem>>, vector<1x16x128xbf16>
    %2 = vector.shape_cast %1 : vector<1x16x128xbf16> to vector<16x128xbf16>
    %cst = arith.constant dense<0.000000e+00> : vector<8x128xf32>
    %3 = tpu.matmul %0, %2, %cst {dimension_numbers = #tpu.dot_dimension_numbers<[1], [0], [0], [1], [0, 0, 1, 1], [], []>} : vector<8x16xbf16>, vector<16x128xbf16>, vector<8x128xf32> -> vector<8x128xf32>
    %c0_4 = arith.constant 0 : index
    %c0_5 = arith.constant 0 : index
    %c0_6 = arith.constant 0 : index
    %4 = vector.load %arg3[%c0_4, %c0_5, %c0_6] : memref<2x1x128xf32, #tpu.memory_space<vmem>>, vector<1x1x128xf32>
    %5 = vector.shape_cast %4 : vector<1x1x128xf32> to vector<1x128xf32>
    %6 = vector.broadcast %5 : vector<1x128xf32> to vector<8x128xf32>
    %7 = arith.addf %3, %6 : vector<8x128xf32>
    %c1 = arith.constant 1 : index
    %c0_7 = arith.constant 0 : index
    %c0_8 = arith.constant 0 : index
    %8 = vector.load %arg2[%c1, %c0_7, %c0_8] : memref<2x16x128xbf16, #tpu.memory_space<vmem>>, vector<1x16x128xbf16>
    %9 = vector.shape_cast %8 : vector<1x16x128xbf16> to vector<16x128xbf16>
    %cst_9 = arith.constant dense<0.000000e+00> : vector<8x128xf32>
    %10 = tpu.matmul %0, %9, %cst_9 {dimension_numbers = #tpu.dot_dimension_numbers<[1], [0], [0], [1], [0, 0, 1, 1], [], []>} : vector<8x16xbf16>, vector<16x128xbf16>, vector<8x128xf32> -> vector<8x128xf32>
    %c1_10 = arith.constant 1 : index
    %c0_11 = arith.constant 0 : index
    %c0_12 = arith.constant 0 : index
    %11 = vector.load %arg3[%c1_10, %c0_11, %c0_12] : memref<2x1x128xf32, #tpu.memory_space<vmem>>, vector<1x1x128xf32>
    %12 = vector.shape_cast %11 : vector<1x1x128xf32> to vector<1x128xf32>
    %13 = vector.broadcast %12 : vector<1x128xf32> to vector<8x128xf32>
    %14 = arith.addf %10, %13 : vector<8x128xf32>
    %15 = arith.maximumf %7, %14 : vector<8x128xf32>
    %c0_13 = arith.constant 0 : index
    %c0_14 = arith.constant 0 : index
    %16 = vector.load %arg4[%c0_13, %c0_14] : memref<8x128xf32, #tpu.memory_space<vmem>>, vector<8x128xf32>
    tpu.vector_store %arg4[%c0_13, %c0_14], %15 {strides = array<i32>} : memref<8x128xf32, #tpu.memory_space<vmem>>, vector<8x128xf32>,
    return
  }
  func.func @transform_0(%arg0: i32) -> (i32, i32) {
    %c0_i32 = arith.constant 0 : i32
    %c0_i32_0 = arith.constant 0 : i32
    return %arg0, %c0_i32 : i32, i32
  }
  func.func @transform_1(%arg0: i32) -> (i32, i32, i32) {
    %c0_i32 = arith.constant 0 : i32
    %c0_i32_0 = arith.constant 0 : i32
    %c0_i32_1 = arith.constant 0 : i32
    %c0_i32_2 = arith.constant 0 : i32
    return %c0_i32, %c0_i32_0, %c0_i32_1 : i32, i32, i32
  }
  func.func @transform_2(%arg0: i32) -> (i32, i32, i32) {
    %c0_i32 = arith.constant 0 : i32
    %c0_i32_0 = arith.constant 0 : i32
    %c0_i32_1 = arith.constant 0 : i32
    %c0_i32_2 = arith.constant 0 : i32
    return %c0_i32, %c0_i32_0, %c0_i32_1 : i32, i32, i32
  }
  func.func @transform_3(%arg0: i32) -> (i32, i32) {
    %c0_i32 = arith.constant 0 : i32
    %c0_i32_0 = arith.constant 0 : i32
    return %arg0, %c0_i32 : i32, i32
  }
}

</mosaic_0001>

<llo_original>
// kernel: tpu_custom_call.1
$region0: #{tpu_custom_call.1}
  #allocation0 [shape = 'u32[]', space=smem, size = 0x4, offset = 0x4, fixed_abs, tag = 'smem constant byte address 0x4 - core index']
  #allocation1 [shape = 'u32[144,128]{1,0:T(1,128)}', space=vmem, size = 0x12000, scoped, tag = 'internal scratch']
  %s0 = inlined_call_operand.hbm [shape: bf16[8,16], index: 0, kind: input, shape index: {}]
  %s1 = inlined_call_operand.hbm [shape: bf16[2,16,128], index: 1, kind: input, shape index: {}]
  %s2 = inlined_call_operand.vmem [shape: f32[2,1,128], index: 2, kind: input, shape index: {}]
  %s3 = inlined_call_operand.hbm [shape: f32[8,128], index: 3, kind: output, shape index: {}]
  %s4 = sld [smem:[#allocation0]]
  $region30: #{tpu_custom_call.1} parent=0
    _
  %s6 = ssub.s32 1, %s4
  %s7 = scalar_select 0, %s6, %s4
  $region1: #{tpu_custom_call.1} parent=0
    #allocation2 [shape = 'u8[2048]{0}', space=vmem, size = 0x800, scoped, tag = 'input window, operand 0, single buffered']
    #allocation3 [shape = 's32[1]{0}', space=sflag, size = 0x4, scoped, tag = 'scoped memory for tpu_custom_call.1']
    #allocation4 [shape = 's32[1]{0}', space=sflag, size = 0x4, scoped, tag = 'scoped memory for tpu_custom_call.1']
    #allocation5 [shape = 'u8[8192]{0}', space=vmem, size = 0x2000, scoped, tag = 'input window, operand 1, single buffered']
    #allocation6 [shape = 's32[1]{0}', space=sflag, size = 0x4, scoped, tag = 'scoped memory for tpu_custom_call.1']
    #allocation7 [shape = 'u8[4096]{0}', space=vmem, size = 0x1000, scoped, tag = 'output window, operand 0, single buffered']
    %8 = vsyncpa [#allocation3], 0
    %9 = vsyncpa [#allocation6], 0
    %10 = vsyncpa [#allocation4], 0
    // Predicated region
    $region2: #{tpu_custom_call.1} parent=1 // pred_check
      _
    $region3: #{tpu_custom_call.1} parent=1 // pred_check_branch
      %12 = sbr.rel (0) target = $region5
    $region4: #{tpu_custom_call.1} parent=1 // pred_region
      %s14 = ssub.s32 64, 64
      %15 = vsyncadd [#allocation3], %s14
      %s17 = sshll.u32 [#allocation2], 4
      %s18 = int_to_ptr.vmem [resolvable:$true] %s17
      %20 = dma.hbm_to_vmem [thread:$0]  %s0, 64, %s18, [#allocation3]
    $region5: #{tpu_custom_call.1} parent=1 // pred_fallthru
      _
    // Predicated region
    $region6: #{tpu_custom_call.1} parent=1 // pred_check
      _
    $region7: #{tpu_custom_call.1} parent=1 // pred_check_branch
      %22 = sbr.rel (0) target = $region9
    $region8: #{tpu_custom_call.1} parent=1 // pred_region
      %s24 = ssub.s32 256, 256
      %25 = vsyncadd [#allocation6], %s24
      %s26 = sshll.u32 [#allocation5], 4
      %s27 = int_to_ptr.vmem [resolvable:$true] %s26
      %32 = dma.hbm_to_vmem [thread:$0]  %s1, 256, %s27, [#allocation6], 64, 64, 4
    $region9: #{tpu_custom_call.1} parent=1 // pred_fallthru
      _
    // Predicated region
    $region10: #{tpu_custom_call.1} parent=1 // pred_check
      _
    $region11: #{tpu_custom_call.1} parent=1 // pred_check_branch
      %34 = sbr.rel (0) target = $region13
    $region12: #{tpu_custom_call.1} parent=1 // pred_region
      _
    $region13: #{tpu_custom_call.1} parent=1 // pred_fallthru
      _
    // Predicated region
    $region14: #{tpu_custom_call.1} parent=1 // pred_check
      _
    $region15: #{tpu_custom_call.1} parent=1 // pred_check_branch
      %36 = sbr.rel (0) target = $region17
    $region16: #{tpu_custom_call.1} parent=1 // pred_region
      %37 = dma.done [#allocation3], 64
    $region17: #{tpu_custom_call.1} parent=1 // pred_fallthru
      _
    // Predicated region
    $region18: #{tpu_custom_call.1} parent=1 // pred_check
      _
    $region19: #{tpu_custom_call.1} parent=1 // pred_check_branch
      %39 = sbr.rel (0) target = $region21
    $region20: #{tpu_custom_call.1} parent=1 // pred_region
      %40 = dma.done [#allocation6], 256
    $region21: #{tpu_custom_call.1} parent=1 // pred_fallthru
      _
    %v42 = vld [vmem:[#allocation2] sm:$0xf]
    %v43 = vld [vmem:[#allocation5] sm:$0xf]
    %v44 = vld [vmem:[#allocation5 + $0x4] sm:$0xf]
    %v45 = vld [vmem:[%s2] sm:$0x1]
    %v47 = vlaneseq
    %v48 = vshrl.u32 %v47, 7
    %v49 = vsub.s32 0, %v48
    %v50 = vrot.slane %v45, %v49
    %v54 = vunpack.c.l.b16 %v43
    %v55 = vunpack.c.l.b16 %v44
    %v56 = vpack.c.b16 %v55, %v54
    %vm58 = vcmask 130048
    %v60 = vsel %vm58, %v42, 0
    %62 = vmatprep.subr.bf16.mxu0 0
    %63 = vmatpush1.bf16.msra.mxu0 %v56
    %64 = vmatprep.subr.bf16.mxu0 0
    %65 = vmatpush1.bf16.msra.mxu0 0
    %66 = vmatprep.subr.bf16.mxu0 0
    %67 = vmatpush1.bf16.msra.mxu0 0
    %68 = vmatprep.subr.bf16.mxu0 0
    %69 = vmatpush1.bf16.msra.mxu0 0
    %70 = vmatprep.subr.bf16.mxu0 0
    %71 = vmatpush1.bf16.msra.mxu0 0
    %72 = vmatprep.subr.bf16.mxu0 0
    %73 = vmatpush1.bf16.msra.mxu0 0
    %74 = vmatprep.subr.bf16.mxu0 0
    %75 = vmatpush1.bf16.msra.mxu0 0
    %76 = vmatprep.subr.bf16.mxu0 0
    %77 = vmatpush1.bf16.msra.mxu0 0
    %78 = vmatprep.subr.bf16.mxu0 0
    %79 = vmatpush1.bf16.msra.mxu0 0
    %80 = vmatprep.subr.bf16.mxu0 0
    %81 = vmatpush1.bf16.msra.mxu0 0
    %82 = vmatprep.subr.bf16.mxu0 0
    %83 = vmatpush1.bf16.msra.mxu0 0
    %84 = vmatprep.subr.bf16.mxu0 0
    %85 = vmatpush1.bf16.msra.mxu0 0
    %86 = vmatprep.subr.bf16.mxu0 0
    %87 = vmatpush1.bf16.msra.mxu0 0
    %88 = vmatprep.subr.bf16.mxu0 0
    %89 = vmatpush1.bf16.msra.mxu0 0
    %90 = vmatprep.subr.bf16.mxu0 0
    %91 = vmatpush1.bf16.msra.mxu0 0
    %92 = vmatprep.subr.bf16.mxu0 0
    %93 = vmatpush1.bf16.msra.mxu0 0
    %94 = vmatprep.mubr.bf16.mxu0 0
    %95 = vmatmul.mubr.bf16.gmra.mrb[0].mxu0 %v60
    %v96 = vpop.f32.mrb[0].mxu0
    %v97 = vadd.f32 %v50, %v96
    %v98 = vpop.f32.mrb[0].mxu0
    %v99 = vpop.f32.mrb[0].mxu0
    %v100 = vpop.f32.mrb[0].mxu0
    %101 = vdwg.mxu0
    %s102 = scalar_lea.vmem [#allocation5], 8
    %v103 = vld [vmem:[%s102] sm:$0xf]
    %v104 = vld [vmem:[%s102 + $0x4] sm:$0xf]
    %s105 = scalar_lea.vmem %s2, 1
    %v106 = vld [vmem:[%s105] sm:$0x1]
    %v108 = vlaneseq
    %v109 = vshrl.u32 %v108, 7
    %v110 = vsub.s32 0, %v109
    %v111 = vrot.slane %v106, %v110
    %v115 = vunpack.c.l.b16 %v103
    %v116 = vunpack.c.l.b16 %v104
    %v117 = vpack.c.b16 %v116, %v115
    %119 = vmatprep.subr.bf16.mxu0 0
    %120 = vmatpush1.bf16.msra.mxu0 %v117
    %121 = vmatprep.subr.bf16.mxu0 0
    %122 = vmatpush1.bf16.msra.mxu0 0
    %123 = vmatprep.subr.bf16.mxu0 0
    %124 = vmatpush1.bf16.msra.mxu0 0
    %125 = vmatprep.subr.bf16.mxu0 0
    %126 = vmatpush1.bf16.msra.mxu0 0
    %127 = vmatprep.subr.bf16.mxu0 0
    %128 = vmatpush1.bf16.msra.mxu0 0
    %129 = vmatprep.subr.bf16.mxu0 0
    %130 = vmatpush1.bf16.msra.mxu0 0
    %131 = vmatprep.subr.bf16.mxu0 0
    %132 = vmatpush1.bf16.msra.mxu0 0
    %133 = vmatprep.subr.bf16.mxu0 0
    %134 = vmatpush1.bf16.msra.mxu0 0
    %135 = vmatprep.subr.bf16.mxu0 0
    %136 = vmatpush1.bf16.msra.mxu0 0
    %137 = vmatprep.subr.bf16.mxu0 0
    %138 = vmatpush1.bf16.msra.mxu0 0
    %139 = vmatprep.subr.bf16.mxu0 0
    %140 = vmatpush1.bf16.msra.mxu0 0
    %141 = vmatprep.subr.bf16.mxu0 0
    %142 = vmatpush1.bf16.msra.mxu0 0
    %143 = vmatprep.subr.bf16.mxu0 0
    %144 = vmatpush1.bf16.msra.mxu0 0
    %145 = vmatprep.subr.bf16.mxu0 0
    %146 = vmatpush1.bf16.msra.mxu0 0
    %147 = vmatprep.subr.bf16.mxu0 0
    %148 = vmatpush1.bf16.msra.mxu0 0
    %149 = vmatprep.subr.bf16.mxu0 0
    %150 = vmatpush1.bf16.msra.mxu0 0
    %151 = vmatprep.mubr.bf16.mxu0 0
    %152 = vmatmul.mubr.bf16.gmra.mrb[0].mxu0 %v60
    %v153 = vpop.f32.mrb[0].mxu0
    %v154 = vadd.f32 %v111, %v153
    %v155 = vpop.f32.mrb[0].mxu0
    %v156 = vpop.f32.mrb[0].mxu0
    %v157 = vpop.f32.mrb[0].mxu0
    %158 = vdwg.mxu0
    %v159 = vmax.f32 %v97, %v154
    %160 = vst [vmem:[#allocation7] sm:$0xff] %v159
    // Predicated region
    $region22: #{tpu_custom_call.1} parent=1 // pred_check
      _
    $region23: #{tpu_custom_call.1} parent=1 // pred_check_branch
      %162 = sbr.rel (0) target = $region25
    $region24: #{tpu_custom_call.1} parent=1 // pred_region
      %s164 = ssub.s32 128, 128
      %165 = vsyncadd [#allocation4], %s164
      %s167 = sshll.u32 [#allocation7], 4
      %s168 = int_to_ptr.vmem [resolvable:$true] %s167
      %170 = dma.vmem_to_hbm [thread:$0]  %s168, 128, %s3, [#allocation4]
    $region25: #{tpu_custom_call.1} parent=1 // pred_fallthru
      _
    // Predicated region
    $region26: #{tpu_custom_call.1} parent=1 // pred_check
      _
    $region27: #{tpu_custom_call.1} parent=1 // pred_check_branch
      %172 = sbr.rel (0) target = $region29
    $region28: #{tpu_custom_call.1} parent=1 // pred_region
      %173 = dma.done [#allocation4], 128
    $region29: #{tpu_custom_call.1} parent=1 // pred_fallthru
      _
    %174 = vsyncpa [#allocation3], 1
    %175 = vsyncpa [#allocation6], 1
    %176 = vsyncpa [#allocation4], 1

// kernel: tpu_custom_call.1
$region0: #{tpu_custom_call.1}
  #allocation0 [shape = 'u32[]', space=smem, size = 0x4, offset = 0x4, fixed_abs, tag = 'smem constant byte address 0x4 - core index']
  #allocation1 [shape = 'u32[144,128]{1,0:T(1,128)}', space=vmem, size = 0x12000, scoped, tag = 'internal scratch']
  %s0 = inlined_call_operand.hbm [shape: bf16[8,16], index: 0, kind: input, shape index: {}]
  %s1 = inlined_call_operand.hbm [shape: bf16[2,16,128], index: 1, kind: input, shape index: {}]
  %s2 = inlined_call_operand.vmem [shape: f32[2,1,128], index: 2, kind: input, shape index: {}]
  %s3 = inlined_call_operand.hbm [shape: f32[8,128], index: 3, kind: output, shape index: {}]
  %s4 = sld [smem:[#allocation0]]
  $region30: #{tpu_custom_call.1} parent=0
    _
  %s6 = ssub.s32 1, %s4
  %s7 = scalar_select 0, %s6, %s4
  $region1: #{tpu_custom_call.1} parent=0
    #allocation2 [shape = 'u8[2048]{0}', space=vmem, size = 0x800, scoped, tag = 'input window, operand 0, single buffered']
    #allocation3 [shape = 's32[1]{0}', space=sflag, size = 0x4, scoped, tag = 'scoped memory for tpu_custom_call.1']
    #allocation4 [shape = 's32[1]{0}', space=sflag, size = 0x4, scoped, tag = 'scoped memory for tpu_custom_call.1']
    #allocation5 [shape = 'u8[8192]{0}', space=vmem, size = 0x2000, scoped, tag = 'input window, operand 1, single buffered']
    #allocation6 [shape = 's32[1]{0}', space=sflag, size = 0x4, scoped, tag = 'scoped memory for tpu_custom_call.1']
    #allocation7 [shape = 'u8[4096]{0}', space=vmem, size = 0x1000, scoped, tag = 'output window, operand 0, single buffered']
    %8 = vsyncpa [#allocation3], 0
    %9 = vsyncpa [#allocation6], 0
    %10 = vsyncpa [#allocation4], 0
    // Predicated region
    $region2: #{tpu_custom_call.1} parent=1 // pred_check
      _
    $region3: #{tpu_custom_call.1} parent=1 // pred_check_branch
      %12 = sbr.rel (0) target = $region5
    $region4: #{tpu_custom_call.1} parent=1 // pred_region
      %s14 = ssub.s32 64, 64
      %15 = vsyncadd [#allocation3], %s14
      %s17 = sshll.u32 [#allocation2], 4
      %s18 = int_to_ptr.vmem [resolvable:$true] %s17
      %20 = dma.hbm_to_vmem [thread:$0]  %s0, 64, %s18, [#allocation3]
    $region5: #{tpu_custom_call.1} parent=1 // pred_fallthru
      _
    // Predicated region
    $region6: #{tpu_custom_call.1} parent=1 // pred_check
      _
    $region7: #{tpu_custom_call.1} parent=1 // pred_check_branch
      %22 = sbr.rel (0) target = $region9
    $region8: #{tpu_custom_call.1} parent=1 // pred_region
      %s24 = ssub.s32 256, 256
      %25 = vsyncadd [#allocation6], %s24
      %s26 = sshll.u32 [#allocation5], 4
      %s27 = int_to_ptr.vmem [resolvable:$true] %s26
      %32 = dma.hbm_to_vmem [thread:$0]  %s1, 256, %s27, [#allocation6], 64, 64, 4
    $region9: #{tpu_custom_call.1} parent=1 // pred_fallthru
      _
    // Predicated region
    $region10: #{tpu_custom_call.1} parent=1 // pred_check
      _
    $region11: #{tpu_custom_call.1} parent=1 // pred_check_branch
      %34 = sbr.rel (0) target = $region13
    $region12: #{tpu_custom_call.1} parent=1 // pred_region
      _
    $region13: #{tpu_custom_call.1} parent=1 // pred_fallthru
      _
    // Predicated region
    $region14: #{tpu_custom_call.1} parent=1 // pred_check
      _
    $region15: #{tpu_custom_call.1} parent=1 // pred_check_branch
      %36 = sbr.rel (0) target = $region17
    $region16: #{tpu_custom_call.1} parent=1 // pred_region
      %37 = dma.done [#allocation3], 64
    $region17: #{tpu_custom_call.1} parent=1 // pred_fallthru
      _
    // Predicated region
    $region18: #{tpu_custom_call.1} parent=1 // pred_check
      _
    $region19: #{tpu_custom_call.1} parent=1 // pred_check_branch
      %39 = sbr.rel (0) target = $region21
    $region20: #{tpu_custom_call.1} parent=1 // pred_region
      %40 = dma.done [#allocation6], 256
    $region21: #{tpu_custom_call.1} parent=1 // pred_fallthru
      _
    %v42 = vld [vmem:[#allocation2] sm:$0xf]
    %v43 = vld [vmem:[#allocation5] sm:$0xf]
    %v44 = vld [vmem:[#allocation5 + $0x4] sm:$0xf]
    %v45 = vld [vmem:[%s2] sm:$0x1]
    %v47 = vlaneseq
    %v48 = vshrl.u32 %v47, 7
    %v49 = vsub.s32 0, %v48
    %v50 = vrot.slane %v45, %v49
    %v54 = vunpack.c.l.b16 %v43
    %v55 = vunpack.c.l.b16 %v44
    %v56 = vpack.c.b16 %v55, %v54
    %vm58 = vcmask 130048
    %v60 = vsel %vm58, %v42, 0
    %62 = vmatprep.subr.bf16.mxu0 0
    %63 = vmatpush1.bf16.msra.mxu0 %v56
    %64 = vmatprep.subr.bf16.mxu0 0
    %65 = vmatpush1.bf16.msra.mxu0 0
    %66 = vmatprep.subr.bf16.mxu0 0
    %67 = vmatpush1.bf16.msra.mxu0 0
    %68 = vmatprep.subr.bf16.mxu0 0
    %69 = vmatpush1.bf16.msra.mxu0 0
    %70 = vmatprep.subr.bf16.mxu0 0
    %71 = vmatpush1.bf16.msra.mxu0 0
    %72 = vmatprep.subr.bf16.mxu0 0
    %73 = vmatpush1.bf16.msra.mxu0 0
    %74 = vmatprep.subr.bf16.mxu0 0
    %75 = vmatpush1.bf16.msra.mxu0 0
    %76 = vmatprep.subr.bf16.mxu0 0
    %77 = vmatpush1.bf16.msra.mxu0 0
    %78 = vmatprep.subr.bf16.mxu0 0
    %79 = vmatpush1.bf16.msra.mxu0 0
    %80 = vmatprep.subr.bf16.mxu0 0
    %81 = vmatpush1.bf16.msra.mxu0 0
    %82 = vmatprep.subr.bf16.mxu0 0
    %83 = vmatpush1.bf16.msra.mxu0 0
    %84 = vmatprep.subr.bf16.mxu0 0
    %85 = vmatpush1.bf16.msra.mxu0 0
    %86 = vmatprep.subr.bf16.mxu0 0
    %87 = vmatpush1.bf16.msra.mxu0 0
    %88 = vmatprep.subr.bf16.mxu0 0
    %89 = vmatpush1.bf16.msra.mxu0 0
    %90 = vmatprep.subr.bf16.mxu0 0
    %91 = vmatpush1.bf16.msra.mxu0 0
    %92 = vmatprep.subr.bf16.mxu0 0
    %93 = vmatpush1.bf16.msra.mxu0 0
    %94 = vmatprep.mubr.bf16.mxu0 0
    %95 = vmatmul.mubr.bf16.gmra.mrb[0].mxu0 %v60
    %v96 = vpop.f32.mrb[0].mxu0
    %v97 = vadd.f32 %v50, %v96
    %v98 = vpop.f32.mrb[0].mxu0
    %v99 = vpop.f32.mrb[0].mxu0
    %v100 = vpop.f32.mrb[0].mxu0
    %101 = vdwg.mxu0
    %s102 = scalar_lea.vmem [#allocation5], 8
    %v103 = vld [vmem:[%s102] sm:$0xf]
    %v104 = vld [vmem:[%s102 + $0x4] sm:$0xf]
    %s105 = scalar_lea.vmem %s2, 1
    %v106 = vld [vmem:[%s105] sm:$0x1]
    %v108 = vlaneseq
    %v109 = vshrl.u32 %v108, 7
    %v110 = vsub.s32 0, %v109
    %v111 = vrot.slane %v106, %v110
    %v115 = vunpack.c.l.b16 %v103
    %v116 = vunpack.c.l.b16 %v104
    %v117 = vpack.c.b16 %v116, %v115
    %119 = vmatprep.subr.bf16.mxu0 0
    %120 = vmatpush1.bf16.msra.mxu0 %v117
    %121 = vmatprep.subr.bf16.mxu0 0
    %122 = vmatpush1.bf16.msra.mxu0 0
    %123 = vmatprep.subr.bf16.mxu0 0
    %124 = vmatpush1.bf16.msra.mxu0 0
    %125 = vmatprep.subr.bf16.mxu0 0
    %126 = vmatpush1.bf16.msra.mxu0 0
    %127 = vmatprep.subr.bf16.mxu0 0
    %128 = vmatpush1.bf16.msra.mxu0 0
    %129 = vmatprep.subr.bf16.mxu0 0
    %130 = vmatpush1.bf16.msra.mxu0 0
    %131 = vmatprep.subr.bf16.mxu0 0
    %132 = vmatpush1.bf16.msra.mxu0 0
    %133 = vmatprep.subr.bf16.mxu0 0
    %134 = vmatpush1.bf16.msra.mxu0 0
    %135 = vmatprep.subr.bf16.mxu0 0
    %136 = vmatpush1.bf16.msra.mxu0 0
    %137 = vmatprep.subr.bf16.mxu0 0
    %138 = vmatpush1.bf16.msra.mxu0 0
    %139 = vmatprep.subr.bf16.mxu0 0
    %140 = vmatpush1.bf16.msra.mxu0 0
    %141 = vmatprep.subr.bf16.mxu0 0
    %142 = vmatpush1.bf16.msra.mxu0 0
    %143 = vmatprep.subr.bf16.mxu0 0
    %144 = vmatpush1.bf16.msra.mxu0 0
    %145 = vmatprep.subr.bf16.mxu0 0
    %146 = vmatpush1.bf16.msra.mxu0 0
    %147 = vmatprep.subr.bf16.mxu0 0
    %148 = vmatpush1.bf16.msra.mxu0 0
    %149 = vmatprep.subr.bf16.mxu0 0
    %150 = vmatpush1.bf16.msra.mxu0 0
    %151 = vmatprep.mubr.bf16.mxu0 0
    %152 = vmatmul.mubr.bf16.gmra.mrb[0].mxu0 %v60
    %v153 = vpop.f32.mrb[0].mxu0
    %v154 = vadd.f32 %v111, %v153
    %v155 = vpop.f32.mrb[0].mxu0
    %v156 = vpop.f32.mrb[0].mxu0
    %v157 = vpop.f32.mrb[0].mxu0
    %158 = vdwg.mxu0
    %v159 = vmax.f32 %v97, %v154
    %160 = vst [vmem:[#allocation7] sm:$0xff] %v159
    // Predicated region
    $region22: #{tpu_custom_call.1} parent=1 // pred_check
      _
    $region23: #{tpu_custom_call.1} parent=1 // pred_check_branch
      %162 = sbr.rel (0) target = $region25
    $region24: #{tpu_custom_call.1} parent=1 // pred_region
      %s164 = ssub.s32 128, 128
      %165 = vsyncadd [#allocation4], %s164
      %s167 = sshll.u32 [#allocation7], 4
      %s168 = int_to_ptr.vmem [resolvable:$true] %s167
      %170 = dma.vmem_to_hbm [thread:$0]  %s168, 128, %s3, [#allocation4]
    $region25: #{tpu_custom_call.1} parent=1 // pred_fallthru
      _
    // Predicated region
    $region26: #{tpu_custom_call.1} parent=1 // pred_check
      _
    $region27: #{tpu_custom_call.1} parent=1 // pred_check_branch
      %172 = sbr.rel (0) target = $region29
    $region28: #{tpu_custom_call.1} parent=1 // pred_region
      %173 = dma.done [#allocation4], 128
    $region29: #{tpu_custom_call.1} parent=1 // pred_fallthru
      _
    %174 = vsyncpa [#allocation3], 1
    %175 = vsyncpa [#allocation6], 1
    %176 = vsyncpa [#allocation4], 1

</llo_original>
